<compile_context>
chip_gen: v7x
topology: tpu7x:2x2x1
jax: 0.10.0
libtpu: 0.0.40
codegen_flags: <defaults>
</compile_context>

<pallas_src>
import functools

import jax
import jax.numpy as jnp
from jax import lax
from jax.experimental import pallas as pl
from jax.experimental.pallas import tpu as pltpu


def _addnorm_kernel(x_ref, y_ref, gamma_ref, beta_ref, o_ref, *,
                    eps, true_hidden, padded_hidden):
    # TODO(synk): training-mode dropout (stateful PRNG mask) not implemented; eval semantics used.
    # Read affine params once (hoisted broadcast), compute in f32.
    gamma = gamma_ref[...].astype(jnp.float32)      # (1, Hp)
    beta = beta_ref[...].astype(jnp.float32)        # (1, Hp)

    s = y_ref[...].astype(jnp.float32) + x_ref[...].astype(jnp.float32)  # (T, Hp)

    if true_hidden != padded_hidden:
        # Mask out lane padding; statistics are over the true hidden width.
        lane = lax.broadcasted_iota(jnp.int32, s.shape, dimension=s.ndim - 1)
        valid = lane < true_hidden
        s = jnp.where(valid, s, 0.0)
        inv_h = 1.0 / float(true_hidden)
        mean = jnp.sum(s, axis=-1, keepdims=True) * inv_h
        centered = jnp.where(valid, s - mean, 0.0)
        var = jnp.sum(centered * centered, axis=-1, keepdims=True) * inv_h
    else:
        mean = jnp.mean(s, axis=-1, keepdims=True)
        centered = s - mean
        var = jnp.mean(centered * centered, axis=-1, keepdims=True)

    inv = lax.rsqrt(var + eps)                      # EUP slot: free at mem-bound
    out = centered * inv * gamma + beta
    o_ref[...] = out.astype(o_ref.dtype)


def add_norm(X, Y, gamma, beta, *, eps=1e-5):
    assert X.shape == Y.shape, "X and Y must have the same shape"
    hidden = X.shape[-1]
    rows = 1
    for d in X.shape[:-1]:
        rows *= d

    itemsize = jnp.dtype(X.dtype).itemsize
    # Sublane packing multiple per dtype width (f32->8, bf16->16, int8/fp8->32).
    sublane = {4: 8, 2: 16, 1: 32}.get(itemsize, 8)

    # Lane-dense last dim: pad hidden up to a multiple of 128.
    Hp = max(128, ((hidden + 127) // 128) * 128)

    # Pick a row tile so each stream block is ~4 MiB:
    #   3 streams x 2 double-buffers x 4 MiB ~= 24 MiB  -> fits all generations
    #   (well under v7x's 64 MiB physical VMEM, amortizes per-step overhead).
    target_block_bytes = 4 * 1024 * 1024
    row_tile = max(sublane, target_block_bytes // (Hp * itemsize))
    row_tile = (row_tile // sublane) * sublane
    rows_rounded = ((rows + sublane - 1) // sublane) * sublane
    row_tile = max(sublane, min(row_tile, rows_rounded))

    rows_p = ((rows + row_tile - 1) // row_tile) * row_tile

    x2 = X.reshape(rows, hidden)
    y2 = Y.reshape(rows, hidden)
    g2 = gamma.reshape(1, hidden)
    b2 = beta.reshape(1, hidden)
    if rows_p != rows or Hp != hidden:
        x2 = jnp.pad(x2, ((0, rows_p - rows), (0, Hp - hidden)))
        y2 = jnp.pad(y2, ((0, rows_p - rows), (0, Hp - hidden)))
    if Hp != hidden:
        g2 = jnp.pad(g2, ((0, 0), (0, Hp - hidden)))
        b2 = jnp.pad(b2, ((0, 0), (0, Hp - hidden)))

    grid = (rows_p // row_tile,)

    kernel = functools.partial(
        _addnorm_kernel, eps=eps, true_hidden=hidden, padded_hidden=Hp)

    # VMEM budget: 3 streams double-buffered + gamma/beta + slack.
    block_bytes = row_tile * Hp * itemsize
    vmem_limit = 6 * block_bytes + 4 * Hp * 4 + (8 << 20)
    vmem_limit = int(min(max(vmem_limit, 16 << 20), 100 << 20))

    out2 = pl.pallas_call(
        kernel,
        out_shape=jax.ShapeDtypeStruct((rows_p, Hp), X.dtype),
        grid_spec=pltpu.PrefetchScalarGridSpec(
            num_scalar_prefetch=0,
            grid=grid,
            in_specs=[
                pl.BlockSpec((row_tile, Hp), lambda i: (i, 0)),
                pl.BlockSpec((row_tile, Hp), lambda i: (i, 0)),
                pl.BlockSpec((1, Hp), lambda i: (0, 0)),
                pl.BlockSpec((1, Hp), lambda i: (0, 0)),
            ],
            out_specs=pl.BlockSpec((row_tile, Hp), lambda i: (i, 0)),
        ),
        compiler_params=pltpu.CompilerParams(
            dimension_semantics=("parallel",),
            vmem_limit_bytes=vmem_limit,
        ),
    )(x2, y2, g2, b2)

    if rows_p != rows or Hp != hidden:
        out2 = out2[:rows, :hidden]
    return out2.reshape(X.shape)


if __name__ == "__main__":
    # Small shapes implied by the forward: (batch, seq, hidden), norm_shape = hidden.
    batch, seq, hidden = 2, 8, 32
    key = jax.random.PRNGKey(0)
    kx, ky = jax.random.split(key)
    X = jax.random.normal(kx, (batch, seq, hidden), dtype=jnp.float32)
    Y = jax.random.normal(ky, (batch, seq, hidden), dtype=jnp.float32)

    # nn.LayerNorm deterministic init: weight = 1, bias = 0.
    gamma = jnp.ones((hidden,), dtype=jnp.float32)
    beta = jnp.zeros((hidden,), dtype=jnp.float32)

    out = add_norm(X, Y, gamma, beta)
    jax.block_until_ready(out)

    # Reference check in plain JAX (dropout is identity in eval mode).
    s = Y + X
    mean = jnp.mean(s, axis=-1, keepdims=True)
    var = jnp.mean((s - mean) ** 2, axis=-1, keepdims=True)
    ref = (s - mean) / jnp.sqrt(var + 1e-5) * gamma + beta
    assert jnp.allclose(out, ref, atol=1e-5, rtol=1e-5), "mismatch vs reference"

    # Second check at a realistic transformer shape (hidden multiple of 128,
    # rows not a multiple of the row tile -> exercises the padded-tail path).
    b2_, s2_, h2_ = 3, 37, 256
    X2 = jax.random.normal(kx, (b2_, s2_, h2_), dtype=jnp.float32)
    Y2 = jax.random.normal(ky, (b2_, s2_, h2_), dtype=jnp.float32)
    g2_ = jax.random.normal(jax.random.PRNGKey(1), (h2_,), dtype=jnp.float32)
    bb2 = jax.random.normal(jax.random.PRNGKey(2), (h2_,), dtype=jnp.float32)
    out2 = add_norm(X2, Y2, g2_, bb2)
    jax.block_until_ready(out2)
    s2 = Y2 + X2
    m2 = jnp.mean(s2, axis=-1, keepdims=True)
    v2 = jnp.mean((s2 - m2) ** 2, axis=-1, keepdims=True)
    ref2 = (s2 - m2) / jnp.sqrt(v2 + 1e-5) * g2_ + bb2
    assert jnp.allclose(out2, ref2, atol=1e-4, rtol=1e-4), "mismatch vs reference (large)"

    print("KERNEL_OK")
</pallas_src>

<mosaic_0001>
module attributes {stable_mosaic.version = 11 : i64} {
  func.func @_addnorm_kernel(%arg0: i32, %arg1: memref<16x128xf32, #tpu.memory_space<vmem>>, %arg2: memref<16x128xf32, #tpu.memory_space<vmem>>, %arg3: memref<1x128xf32, #tpu.memory_space<vmem>>, %arg4: memref<1x128xf32, #tpu.memory_space<vmem>>, %arg5: memref<16x128xf32, #tpu.memory_space<vmem>>) attributes {dimension_semantics = [#tpu.dimension_semantics<parallel>], iteration_bounds = array<i64: 1>, scalar_prefetch = 0 : i64, scratch_operands = 0 : i64, tpu.core_type = #tpu.core_type<tc>, window_params = [{transform_indices = @transform_0, window_bounds = array<i64: 16, 128>}, {transform_indices = @transform_1, window_bounds = array<i64: 16, 128>}, {pipeline_mode = #tpu.pipeline_mode<synchronous>, transform_indices = @transform_2, window_bounds = array<i64: 1, 128>}, {pipeline_mode = #tpu.pipeline_mode<synchronous>, transform_indices = @transform_3, window_bounds = array<i64: 1, 128>}, {transform_indices = @transform_4, window_bounds = array<i64: 16, 128>}]} {
    %c0 = arith.constant 0 : index
    %c0_0 = arith.constant 0 : index
    %0 = vector.load %arg3[%c0, %c0_0] : memref<1x128xf32, #tpu.memory_space<vmem>>, vector<1x128xf32>
    %c0_1 = arith.constant 0 : index
    %c0_2 = arith.constant 0 : index
    %1 = vector.load %arg4[%c0_1, %c0_2] : memref<1x128xf32, #tpu.memory_space<vmem>>, vector<1x128xf32>
    %c0_3 = arith.constant 0 : index
    %c0_4 = arith.constant 0 : index
    %2 = vector.load %arg2[%c0_3, %c0_4] : memref<16x128xf32, #tpu.memory_space<vmem>>, vector<16x128xf32>
    %c0_5 = arith.constant 0 : index
    %c0_6 = arith.constant 0 : index
    %3 = vector.load %arg1[%c0_5, %c0_6] : memref<16x128xf32, #tpu.memory_space<vmem>>, vector<16x128xf32>
    %4 = arith.addf %2, %3 : vector<16x128xf32>
    %5 = tpu.iota {dimensions = array<i32: 1>} : vector<16x128xi32>
    %c32_i32 = arith.constant 32 : i32
    %6 = vector.broadcast %c32_i32 : i32 to vector<16x128xi32>
    %7 = arith.cmpi slt, %5, %6 : vector<16x128xi32>
    %cst = arith.constant 0.000000e+00 : f32
    %8 = vector.broadcast %cst : f32 to vector<16x128xf32>
    %9 = arith.select %7, %4, %8 : vector<16x128xi1>, vector<16x128xf32>
    %cst_7 = arith.constant dense<0.000000e+00> : vector<16xf32>
    %10 = vector.multi_reduction <add>, %9, %cst_7 [1] : vector<16x128xf32> to vector<16xf32>
    %11 = vector.shape_cast %10 : vector<16xf32> to vector<16x1xf32>
    %cst_8 = arith.constant 3.125000e-02 : f32
    %12 = vector.broadcast %cst_8 : f32 to vector<16x1xf32>
    %13 = arith.mulf %11, %12 : vector<16x1xf32>
    %14 = vector.broadcast %13 : vector<16x1xf32> to vector<16x128xf32>
    %15 = arith.subf %9, %14 : vector<16x128xf32>
    %cst_9 = arith.constant 0.000000e+00 : f32
    %16 = vector.broadcast %cst_9 : f32 to vector<16x128xf32>
    %17 = arith.select %7, %15, %16 : vector<16x128xi1>, vector<16x128xf32>
    %18 = arith.mulf %17, %17 : vector<16x128xf32>
    %cst_10 = arith.constant dense<0.000000e+00> : vector<16xf32>
    %19 = vector.multi_reduction <add>, %18, %cst_10 [1] : vector<16x128xf32> to vector<16xf32>
    %20 = vector.shape_cast %19 : vector<16xf32> to vector<16x1xf32>
    %cst_11 = arith.constant 3.125000e-02 : f32
    %21 = vector.broadcast %cst_11 : f32 to vector<16x1xf32>
    %22 = arith.mulf %20, %21 : vector<16x1xf32>
    %cst_12 = arith.constant 9.99999974E-6 : f32
    %23 = vector.broadcast %cst_12 : f32 to vector<16x1xf32>
    %24 = arith.addf %22, %23 : vector<16x1xf32>
    %25 = math.rsqrt %24 : vector<16x1xf32>
    %26 = vector.broadcast %25 : vector<16x1xf32> to vector<16x128xf32>
    %27 = arith.mulf %17, %26 : vector<16x128xf32>
    %28 = vector.broadcast %0 : vector<1x128xf32> to vector<16x128xf32>
    %29 = arith.mulf %27, %28 : vector<16x128xf32>
    %30 = vector.broadcast %1 : vector<1x128xf32> to vector<16x128xf32>
    %31 = arith.addf %29, %30 : vector<16x128xf32>
    %c0_13 = arith.constant 0 : index
    %c0_14 = arith.constant 0 : index
    %32 = vector.load %arg5[%c0_13, %c0_14] : memref<16x128xf32, #tpu.memory_space<vmem>>, vector<16x128xf32>
    tpu.vector_store %arg5[%c0_13, %c0_14], %31 {strides = array<i32>} : memref<16x128xf32, #tpu.memory_space<vmem>>, vector<16x128xf32>,
    return
  }
  func.func @transform_0(%arg0: i32) -> (i32, i32) {
    %c0_i32 = arith.constant 0 : i32
    %c0_i32_0 = arith.constant 0 : i32
    return %arg0, %c0_i32 : i32, i32
  }
  func.func @transform_1(%arg0: i32) -> (i32, i32) {
    %c0_i32 = arith.constant 0 : i32
    %c0_i32_0 = arith.constant 0 : i32
    return %arg0, %c0_i32 : i32, i32
  }
  func.func @transform_2(%arg0: i32) -> (i32, i32) {
    %c0_i32 = arith.constant 0 : i32
    %c0_i32_0 = arith.constant 0 : i32
    %c0_i32_1 = arith.constant 0 : i32
    return %c0_i32, %c0_i32_0 : i32, i32
  }
  func.func @transform_3(%arg0: i32) -> (i32, i32) {
    %c0_i32 = arith.constant 0 : i32
    %c0_i32_0 = arith.constant 0 : i32
    %c0_i32_1 = arith.constant 0 : i32
    return %c0_i32, %c0_i32_0 : i32, i32
  }
  func.func @transform_4(%arg0: i32) -> (i32, i32) {
    %c0_i32 = arith.constant 0 : i32
    %c0_i32_0 = arith.constant 0 : i32
    return %arg0, %c0_i32 : i32, i32
  }
}

</mosaic_0001>

<llo_original>
// kernel: tpu_custom_call.1
$region0: #{tpu_custom_call.1}
  #allocation0 [shape = 'u32[]', space=smem, size = 0x4, offset = 0x4, fixed_abs, tag = 'smem constant byte address 0x4 - core index']
  #allocation1 [shape = 'u32[144,128]{1,0:T(1,128)}', space=vmem, size = 0x12000, scoped, tag = 'internal scratch']
  %s0 = inlined_call_operand.hbm [shape: f32[16,128], index: 0, kind: input, shape index: {}]
  %s1 = inlined_call_operand.hbm [shape: f32[16,128], index: 1, kind: input, shape index: {}]
  %s2 = inlined_call_operand.vmem [shape: f32[1,128], index: 2, kind: input, shape index: {}]
  %s3 = inlined_call_operand.vmem [shape: f32[1,128], index: 3, kind: input, shape index: {}]
  %s4 = inlined_call_operand.hbm [shape: f32[16,128], index: 4, kind: output, shape index: {}]
  %s5 = sld [smem:[#allocation0]]
  $region34: #{tpu_custom_call.1} parent=0
    _
  %s7 = ssub.s32 1, %s5
  %s8 = scalar_select 0, %s7, %s5
  $region1: #{tpu_custom_call.1} parent=0
    #allocation2 [shape = 'u8[8192]{0}', space=vmem, size = 0x2000, scoped, tag = 'input window, operand 0, single buffered']
    #allocation3 [shape = 's32[1]{0}', space=sflag, size = 0x4, scoped, tag = 'scoped memory for tpu_custom_call.1']
    #allocation4 [shape = 's32[1]{0}', space=sflag, size = 0x4, scoped, tag = 'scoped memory for tpu_custom_call.1']
    #allocation5 [shape = 'u8[8192]{0}', space=vmem, size = 0x2000, scoped, tag = 'input window, operand 1, single buffered']
    #allocation6 [shape = 's32[1]{0}', space=sflag, size = 0x4, scoped, tag = 'scoped memory for tpu_custom_call.1']
    #allocation7 [shape = 'u8[8192]{0}', space=vmem, size = 0x2000, scoped, tag = 'output window, operand 0, single buffered']
    %9 = vsyncpa [#allocation3], 0
    %10 = vsyncpa [#allocation6], 0
    %11 = vsyncpa [#allocation4], 0
    // Predicated region
    $region2: #{tpu_custom_call.1} parent=1 // pred_check
      _
    $region3: #{tpu_custom_call.1} parent=1 // pred_check_branch
      %13 = sbr.rel (0) target = $region5
    $region4: #{tpu_custom_call.1} parent=1 // pred_region
      %s15 = ssub.s32 256, 256
      %16 = vsyncadd [#allocation3], %s15
      %s17 = sshll.u32 [#allocation2], 4
      %s18 = int_to_ptr.vmem [resolvable:$true] %s17
      %23 = dma.hbm_to_vmem [thread:$0]  %s0, 256, %s18, [#allocation3], 128, 128, 8
    $region5: #{tpu_custom_call.1} parent=1 // pred_fallthru
      _
    // Predicated region
    $region6: #{tpu_custom_call.1} parent=1 // pred_check
      _
    $region7: #{tpu_custom_call.1} parent=1 // pred_check_branch
      %25 = sbr.rel (0) target = $region9
    $region8: #{tpu_custom_call.1} parent=1 // pred_region
      %s27 = ssub.s32 256, 256
      %28 = vsyncadd [#allocation6], %s27
      %s29 = sshll.u32 [#allocation5], 4
      %s30 = int_to_ptr.vmem [resolvable:$true] %s29
      %35 = dma.hbm_to_vmem [thread:$0]  %s1, 256, %s30, [#allocation6], 128, 128, 8
    $region9: #{tpu_custom_call.1} parent=1 // pred_fallthru
      _
    // Predicated region
    $region10: #{tpu_custom_call.1} parent=1 // pred_check
      _
    $region11: #{tpu_custom_call.1} parent=1 // pred_check_branch
      %37 = sbr.rel (0) target = $region13
    $region12: #{tpu_custom_call.1} parent=1 // pred_region
      _
    $region13: #{tpu_custom_call.1} parent=1 // pred_fallthru
      _
    // Predicated region
    $region14: #{tpu_custom_call.1} parent=1 // pred_check
      _
    $region15: #{tpu_custom_call.1} parent=1 // pred_check_branch
      %39 = sbr.rel (0) target = $region17
    $region16: #{tpu_custom_call.1} parent=1 // pred_region
      _
    $region17: #{tpu_custom_call.1} parent=1 // pred_fallthru
      _
    // Predicated region
    $region18: #{tpu_custom_call.1} parent=1 // pred_check
      _
    $region19: #{tpu_custom_call.1} parent=1 // pred_check_branch
      %41 = sbr.rel (0) target = $region21
    $region20: #{tpu_custom_call.1} parent=1 // pred_region
      %42 = dma.done [#allocation3], 256
    $region21: #{tpu_custom_call.1} parent=1 // pred_fallthru
      _
    // Predicated region
    $region22: #{tpu_custom_call.1} parent=1 // pred_check
      _
    $region23: #{tpu_custom_call.1} parent=1 // pred_check_branch
      %44 = sbr.rel (0) target = $region25
    $region24: #{tpu_custom_call.1} parent=1 // pred_region
      %45 = dma.done [#allocation6], 256
    $region25: #{tpu_custom_call.1} parent=1 // pred_fallthru
      _
    %v46 = vld [vmem:[%s2] sm:$0x1]
    %v47 = vld [vmem:[%s3] sm:$0x1]
    %v48 = vld [vmem:[#allocation5] sm:$0xff]
    %v49 = vld [vmem:[#allocation5 + $0x8] sm:$0xff]
    %v50 = vld [vmem:[#allocation2] sm:$0xff]
    %v51 = vld [vmem:[#allocation2 + $0x8] sm:$0xff]
    %v52 = vadd.f32 %v48, %v50
    %v53 = vadd.f32 %v49, %v51
    %v54 = vlaneseq
    %v55 = vand.u32 %v54, 127
    %vm56 = vcmp.lt.s32.totalorder %v55, 32
    %v57 = vsel %vm56, %v52, 0.0
    %v58 = vsel %vm56, %v53, 0.0
    %59 = vadd.xlane.f32.xlu0 %v57
    %v60 = vpop.xlane.xlu0 %59
    %61 = vadd.xlane.f32.xlu0 %v58
    %v62 = vpop.xlane.xlu0 %61
    %v63 = vmul.f32 %v60, 0.03125
    %v64 = vmul.f32 %v62, 0.03125
    %v65 = vsub.f32 %v57, %v63
    %v66 = vsub.f32 %v58, %v64
    %v67 = vsel %vm56, %v65, 0.0
    %v68 = vsel %vm56, %v66, 0.0
    %v69 = vmul.f32 %v67, %v67
    %v70 = vmul.f32 %v68, %v68
    %71 = vadd.xlane.f32.xlu0 %v69
    %v72 = vpop.xlane.xlu0 %71
    %73 = vadd.xlane.f32.xlu0 %v70
    %v74 = vpop.xlane.xlu0 %73
    %v75 = vmul.f32 %v72, 0.03125
    %v76 = vmul.f32 %v74, 0.03125
    %v77 = vadd.f32 %v75, 1e-05
    %v78 = vadd.f32 %v76, 1e-05
    %v79 = vrsqrt.pop %v77
    %v80 = vrsqrt.pop %v78
    %v81 = vmul.f32 %v67, %v79
    %v82 = vmul.f32 %v68, %v80
    %v84 = vlaneseq
    %v85 = vshrl.u32 %v84, 7
    %v86 = vsub.s32 0, %v85
    %v87 = vrot.slane %v46, %v86
    %v89 = vmul.f32 %v81, %v87
    %v90 = vmul.f32 %v82, %v87
    %v92 = vlaneseq
    %v93 = vshrl.u32 %v92, 7
    %v94 = vsub.s32 0, %v93
    %v95 = vrot.slane %v47, %v94
    %v97 = vadd.f32 %v89, %v95
    %v98 = vadd.f32 %v90, %v95
    %99 = vst [vmem:[#allocation7] sm:$0xff] %v97
    %100 = vst [vmem:[#allocation7 + $0x8] sm:$0xff] %v98
    // Predicated region
    $region26: #{tpu_custom_call.1} parent=1 // pred_check
      _
    $region27: #{tpu_custom_call.1} parent=1 // pred_check_branch
      %102 = sbr.rel (0) target = $region29
    $region28: #{tpu_custom_call.1} parent=1 // pred_region
      %s104 = ssub.s32 256, 256
      %105 = vsyncadd [#allocation4], %s104
      %s106 = sshll.u32 [#allocation7], 4
      %s107 = int_to_ptr.vmem [resolvable:$true] %s106
      %112 = dma.vmem_to_hbm [thread:$0]  %s107, 256, %s4, [#allocation4], 128, 128, 8
    $region29: #{tpu_custom_call.1} parent=1 // pred_fallthru
      _
    // Predicated region
    $region30: #{tpu_custom_call.1} parent=1 // pred_check
      _
    $region31: #{tpu_custom_call.1} parent=1 // pred_check_branch
      %114 = sbr.rel (0) target = $region33
    $region32: #{tpu_custom_call.1} parent=1 // pred_region
      %115 = dma.done [#allocation4], 256
    $region33: #{tpu_custom_call.1} parent=1 // pred_fallthru
      _
    %116 = vsyncpa [#allocation3], 1
    %117 = vsyncpa [#allocation6], 1
    %118 = vsyncpa [#allocation4], 1

</llo_original>
